<compile_context>
chip_gen: v7x
topology: tpu7x:2x2x1
jax: 0.10.0
libtpu: 0.0.40
codegen_flags: <defaults>
</compile_context>

<pallas_src>
from functools import partial

import jax
import jax.numpy as jnp
from jax.experimental import pallas as pl
from jax.experimental.pallas import tpu as pltpu


def _round_up(x, m):
    return ((x + m - 1) // m) * m


def _vmem_budget_bytes():
    """Per-generation VMEM working-set budget (v5e/v6e ~96 MiB, v7x ~48 MiB)."""
    cap = 128 * 1024 * 1024
    try:
        info = pltpu.get_tpu_info()
        cap = int(getattr(info, "vmem_capacity_bytes", cap))
    except Exception:  # interpret mode / API unavailable -> conservative default
        pass
    return min(96 * 1024 * 1024, (cap * 3) // 4)


def _vmem_estimate(tm, tk, tn, counts_itemsize, feat_itemsize):
    """Rough double-buffered VMEM working set for one grid step."""
    return (
        2 * tm * tk * counts_itemsize      # counts tile (double-buffered)
        + 2 * tk * tn * feat_itemsize      # features tile
        + 2 * tm * 128 * 4                 # 1/deg column (lane-padded to 128)
        + 2 * tm * tn * feat_itemsize      # output tile
        + tm * tn * 4                      # f32 accumulator scratch
    )


def _mean_agg_kernel(kt_ids_ref, kt_cnt_ref, counts_ref, feat_ref, inv_deg_ref,
                     out_ref, acc_ref, *, cast_counts):
    """acc[i,:] += counts[i, active k-tile] @ feat[k-tile,:]; finalize: * 1/deg."""
    del kt_ids_ref  # consumed only by the index_maps
    i = pl.program_id(0)
    k = pl.program_id(2)

    @pl.when(k == 0)
    def _init():
        acc_ref[...] = jnp.zeros_like(acc_ref)

    # Skip padded k-steps (this M-block has fewer active k-tiles than the max).
    @pl.when(k < kt_cnt_ref[i])
    def _accum():
        c = counts_ref[...]
        if cast_counts:
            # int8 in HBM -> feature dtype on the VPU, then bf16/f32 MXU matmul
            # (works on v5e/v6e/v7x; never feeds int8 to the MXU).
            c = c.astype(feat_ref.dtype)
        acc_ref[...] += jnp.dot(c, feat_ref[...], preferred_element_type=jnp.float32)

    @pl.when(k == pl.num_programs(2) - 1)
    def _finalize():
        # Per-row mean scale on the f32 accumulator; cheap VPU op.
        out_ref[...] = (acc_ref[...] * inv_deg_ref[...]).astype(out_ref.dtype)


def mean_aggregate_pallas(features, neighbors, *, tm_max=None, tn_max=None,
                          tk_max=None):
    """Mean-aggregate `features` rows over ragged python `neighbors` lists.

    features : jnp array [N_feat, D]  (bf16 recommended)
    neighbors: list (len N_nodes) of lists of int row indices into `features`
    returns  : jnp array [N_nodes, D] in features.dtype
    """
    n_feat, d = features.shape
    n_nodes = len(neighbors)
    compute_dtype = features.dtype
    feat_itemsize = jnp.dtype(compute_dtype).itemsize

    # ---- glue: degree / count dtype decisions (static, host-side) -----------
    max_deg = max((len(nb) for nb in neighbors), default=0)
    max_deg = max(max_deg, 1)  # keep shapes static even if everything is empty
    counts_is_int8 = max_deg <= 127  # int8 holds any per-row neighbor count
    counts_dtype = jnp.int8 if counts_is_int8 else compute_dtype
    counts_itemsize = jnp.dtype(counts_dtype).itemsize

    # ---- generation-aware tile selection ------------------------------------
    k128 = _round_up(n_feat, 128)
    n128 = _round_up(d, 128)
    m16 = _round_up(max(n_nodes, 1), 16)
    budget = _vmem_budget_bytes()

    resident = (tn_max is None and tk_max is None
                and 2 * k128 * n128 * feat_itemsize <= budget // 2)
    if resident:
        # Features fit in VMEM: DMA once, k grid collapses to the active-tile
        # count (== 1), no re-streaming at all.
        tk, tn = k128, n128
    else:
        if tn_max is not None:
            tn = min(_round_up(tn_max, 128), n128)
        else:
            tn = n128 if n128 <= 512 else 512     # full-D tn -> j grid of 1
        if tk_max is not None:
            tk = min(_round_up(tk_max, 128), k128)
        else:
            tk = min(1024, k128)

    m_granule = 32 if counts_is_int8 else 16      # int8 sublane-pack friendly
    if tm_max is not None:
        tm = min(_round_up(tm_max, m_granule), _round_up(m16, m_granule))
    else:
        tm = 2048
        if m16 >= 2 * m_granule:
            # Keep >= 2 M-blocks so v7x's two TensorCores both get work.
            tm = min(tm, _round_up(m16 // 2, m_granule))
        tm = min(tm, _round_up(m16, m_granule))
        while (tm > m_granule and
               _vmem_estimate(tm, tk, tn, counts_itemsize, feat_itemsize) > budget):
            tm = _round_up(tm // 2, m_granule)
    tm = max(tm, m_granule)

    m_pad = _round_up(m16, tm)
    k_pad = _round_up(k128, tk)
    n_pad = _round_up(n128, tn)
    m_blocks, n_blocks = m_pad // tm, n_pad // tn

    # ---- glue: ragged lists -> dense neighbor counts + 1/deg ----------------
    idx = jnp.array(
        [nb + [-1] * (max_deg - len(nb)) for nb in neighbors] or [[-1] * max_deg],
        dtype=jnp.int32,
    )[:n_nodes]                                               # [N_nodes, max_deg]
    valid = idx >= 0
    safe_idx = jnp.where(valid, idx, 0)                       # padding adds 0
    row_ids = jnp.broadcast_to(
        jnp.arange(n_nodes, dtype=jnp.int32)[:, None], idx.shape
    )
    counts = (
        jnp.zeros((m_pad, k_pad), jnp.float32)
        .at[row_ids, safe_idx]
        .add(valid.astype(jnp.float32))
        .astype(counts_dtype)
    )                                                         # [m_pad, k_pad]
    deg = valid.sum(axis=1).astype(jnp.float32)               # [N_nodes]
    inv = jnp.where(deg > 0, 1.0 / jnp.maximum(deg, 1.0), 0.0)
    inv_deg = jnp.zeros((m_pad, 1), jnp.float32).at[:n_nodes, 0].set(inv)

    feat_pad = (
        jnp.zeros((k_pad, n_pad), compute_dtype)
        .at[:n_feat, :d]
        .set(features.astype(compute_dtype))
    )

    # ---- block-sparse k-tile schedule (static, from the python lists) -------
    kt_lists = []
    for b in range(m_blocks):
        blk = neighbors[b * tm:(b + 1) * tm]
        kt_lists.append(sorted({int(j) // tk for nb in blk for j in nb}))
    max_act = max(max((len(t) for t in kt_lists), default=0), 1)
    kt_ids_host, kt_cnt_host = [], []
    for tiles in kt_lists:
        kt_cnt_host.append(len(tiles))
        pad_val = tiles[-1] if tiles else 0       # valid block idx; step skipped
        kt_ids_host.extend(tiles + [pad_val] * (max_act - len(tiles)))
    kt_ids = jnp.asarray(kt_ids_host, dtype=jnp.int32)        # [m_blocks*max_act]
    kt_cnt = jnp.asarray(kt_cnt_host, dtype=jnp.int32)        # [m_blocks]

    # ---- data-dependent index maps (scalar prefetch refs trail the grid) ----
    def counts_map(i, j, k, ids, cnt):
        return (i, ids[i * max_act + k])

    def feat_map(i, j, k, ids, cnt):
        return (ids[i * max_act + k], j)

    def invdeg_map(i, j, k, ids, cnt):
        return (i, 0)

    def out_map(i, j, k, ids, cnt):
        return (i, j)

    # ---- cost estimate with true re-streaming -------------------------------
    steps = m_blocks * n_blocks * max_act
    cost = pl.CostEstimate(
        flops=2 * steps * tm * tn * tk,
        transcendentals=0,
        bytes_accessed=(
            steps * (tm * tk * counts_itemsize + tk * tn * feat_itemsize + tm * 4)
            + m_pad * n_pad * feat_itemsize
        ),
    )

    out_pad = pl.pallas_call(
        partial(_mean_agg_kernel, cast_counts=counts_is_int8),
        out_shape=jax.ShapeDtypeStruct((m_pad, n_pad), compute_dtype),
        grid_spec=pltpu.PrefetchScalarGridSpec(
            num_scalar_prefetch=2,
            grid=(m_blocks, n_blocks, max_act),
            in_specs=[
                pl.BlockSpec((tm, tk), counts_map),    # int8 counts
                pl.BlockSpec((tk, tn), feat_map),      # features
                pl.BlockSpec((tm, 1), invdeg_map),     # 1/deg column
            ],
            out_specs=pl.BlockSpec((tm, tn), out_map),
            scratch_shapes=[pltpu.VMEM((tm, tn), jnp.float32)],
        ),
        compiler_params=pltpu.CompilerParams(
            dimension_semantics=("parallel", "parallel", "arbitrary"),
            vmem_limit_bytes=int(budget),
        ),
        cost_estimate=cost,
    )(kt_ids, kt_cnt, counts, feat_pad, inv_deg)

    return out_pad[:n_nodes, :d]


def _reference_mean_aggregate(features, neighbors):
    """Pure-JAX reference mirroring the PyTorch loop exactly (f32)."""
    rows = []
    for nb in neighbors:
        if not nb:
            rows.append(jnp.zeros_like(features[0]))
        else:
            rows.append(jnp.mean(features[jnp.array(nb)], axis=0))
    return jnp.stack(rows)


if __name__ == "__main__":
    key = jax.random.PRNGKey(0)
    n_nodes, n_feat, d = 40, 300, 160

    features_f32 = jax.random.normal(key, (n_feat, d), dtype=jnp.float32)
    features = features_f32.astype(jnp.bfloat16)  # bf16 operands -> MXU fast path

    # Deterministic ragged neighbor lists. Nodes < 32 only reference feature
    # rows < 128 (one active k-tile); later nodes span the whole range, so the
    # two M-blocks have different active-k-tile counts and exercise the
    # block-sparse skip path. Includes empties and a duplicate neighbor.
    neighbors = []
    for i in range(n_nodes):
        deg = i % 5
        if i < 32:
            nb = [(i * 7 + 3 * j) % 128 for j in range(deg)]
        else:
            nb = [(i * 11 + 97 * j) % n_feat for j in range(deg)]
        neighbors.append(nb)
    neighbors[3] = [5, 5, 7]        # duplicate neighbor -> count 2
    neighbors[36] = [10, 150, 290]  # one row touching all three k-tiles

    ref = _reference_mean_aggregate(features.astype(jnp.float32), neighbors)

    # Path 1: auto (generation-aware) tiling -> resident-feature, single k step.
    out_auto = mean_aggregate_pallas(features, neighbors)
    out_auto = jax.block_until_ready(out_auto)
    assert out_auto.shape == ref.shape == (n_nodes, d)
    err_auto = jnp.max(jnp.abs(out_auto.astype(jnp.float32) - ref))
    assert err_auto < 3e-2, f"auto-tiling mismatch, max abs err = {err_auto}"

    # Path 2: small explicit tiles -> real (2, 2, 3) grid with per-M-block
    # block-sparse k-tile skipping and int8 counts upcast in-kernel.
    out_tiled = mean_aggregate_pallas(
        features, neighbors, tm_max=32, tn_max=128, tk_max=128
    )
    out_tiled = jax.block_until_ready(out_tiled)
    err_tiled = jnp.max(jnp.abs(out_tiled.astype(jnp.float32) - ref))
    assert err_tiled < 3e-2, f"tiled mismatch, max abs err = {err_tiled}"

    print("KERNEL_OK")
</pallas_src>

<mosaic_0001>
module attributes {stable_mosaic.version = 11 : i64} {
  func.func @_mean_agg_kernel(%arg0: i32, %arg1: i32, %arg2: i32, %arg3: memref<1xi32, #tpu.memory_space<smem>>, %arg4: memref<1xi32, #tpu.memory_space<smem>>, %arg5: memref<64x384xi8, #tpu.memory_space<vmem>>, %arg6: memref<384x256xbf16, #tpu.memory_space<vmem>>, %arg7: memref<64x1xf32, #tpu.memory_space<vmem>>, %arg8: memref<64x256xbf16, #tpu.memory_space<vmem>>, %arg9: memref<64x256xf32, #tpu.memory_space<vmem>>) attributes {dimension_semantics = [#tpu.dimension_semantics<parallel>, #tpu.dimension_semantics<parallel>, #tpu.dimension_semantics<arbitrary>], iteration_bounds = array<i64: 1, 1, 1>, scalar_prefetch = 2 : i64, scratch_operands = 1 : i64, tpu.core_type = #tpu.core_type<tc>, window_params = [{transform_indices = @transform_0, window_bounds = array<i64: 64, 384>}, {transform_indices = @transform_1, window_bounds = array<i64: 384, 256>}, {transform_indices = @transform_2, window_bounds = array<i64: 64, 1>}, {transform_indices = @transform_3, window_bounds = array<i64: 64, 256>}]} {
    %c0_i32 = arith.constant 0 : i32
    %0 = arith.cmpi eq, %arg2, %c0_i32 : i32
    %1 = arith.extui %0 : i1 to i32
    %c0_i32_0 = arith.constant 0 : i32
    %2 = arith.cmpi ne, %1, %c0_i32_0 : i32
    scf.if %2 {
      %cst = arith.constant 0.000000e+00 : f32
      %11 = vector.broadcast %cst : f32 to vector<64x256xf32>
      %c0 = arith.constant 0 : index
      %c0_4 = arith.constant 0 : index
      %12 = vector.load %arg9[%c0, %c0_4] : memref<64x256xf32, #tpu.memory_space<vmem>>, vector<64x256xf32>
      tpu.vector_store %arg9[%c0, %c0_4], %11 {strides = array<i32>} : memref<64x256xf32, #tpu.memory_space<vmem>>, vector<64x256xf32>,
    } else {
    }
    %3 = arith.index_cast %arg0 : i32 to index
    %4 = memref.load %arg4[%3] : memref<1xi32, #tpu.memory_space<smem>>
    %5 = arith.cmpi slt, %arg2, %4 : i32
    %6 = arith.extui %5 : i1 to i32
    %c0_i32_1 = arith.constant 0 : i32
    %7 = arith.cmpi ne, %6, %c0_i32_1 : i32
    scf.if %7 {
      %c0 = arith.constant 0 : index
      %c0_4 = arith.constant 0 : index
      %11 = vector.load %arg5[%c0, %c0_4] : memref<64x384xi8, #tpu.memory_space<vmem>>, vector<64x384xi8>
      %12 = arith.sitofp %11 : vector<64x384xi8> to vector<64x384xbf16>
      %c0_5 = arith.constant 0 : index
      %c0_6 = arith.constant 0 : index
      %13 = vector.load %arg9[%c0_5, %c0_6] : memref<64x256xf32, #tpu.memory_space<vmem>>, vector<64x256xf32>
      %c0_7 = arith.constant 0 : index
      %c0_8 = arith.constant 0 : index
      %14 = vector.load %arg6[%c0_7, %c0_8] : memref<384x256xbf16, #tpu.memory_space<vmem>>, vector<384x256xbf16>
      %cst = arith.constant dense<0.000000e+00> : vector<64x256xf32>
      %15 = tpu.matmul %12, %14, %cst {dimension_numbers = #tpu.dot_dimension_numbers<[1], [0], [0], [1], [0, 0, 1, 1], [], []>} : vector<64x384xbf16>, vector<384x256xbf16>, vector<64x256xf32> -> vector<64x256xf32>
      %16 = arith.addf %13, %15 : vector<64x256xf32>
      %c0_9 = arith.constant 0 : index
      %c0_10 = arith.constant 0 : index
      %17 = vector.load %arg9[%c0_9, %c0_10] : memref<64x256xf32, #tpu.memory_space<vmem>>, vector<64x256xf32>
      tpu.vector_store %arg9[%c0_9, %c0_10], %16 {strides = array<i32>} : memref<64x256xf32, #tpu.memory_space<vmem>>, vector<64x256xf32>,
    } else {
    }
    %c0_i32_2 = arith.constant 0 : i32
    %8 = arith.cmpi eq, %arg2, %c0_i32_2 : i32
    %9 = arith.extui %8 : i1 to i32
    %c0_i32_3 = arith.constant 0 : i32
    %10 = arith.cmpi ne, %9, %c0_i32_3 : i32
    scf.if %10 {
      %c0 = arith.constant 0 : index
      %c0_4 = arith.constant 0 : index
      %11 = vector.load %arg9[%c0, %c0_4] : memref<64x256xf32, #tpu.memory_space<vmem>>, vector<64x256xf32>
      %c0_5 = arith.constant 0 : index
      %c0_6 = arith.constant 0 : index
      %12 = vector.load %arg7[%c0_5, %c0_6] : memref<64x1xf32, #tpu.memory_space<vmem>>, vector<64x1xf32>
      %13 = vector.broadcast %12 : vector<64x1xf32> to vector<64x256xf32>
      %14 = arith.mulf %11, %13 : vector<64x256xf32>
      %15 = arith.truncf %14 : vector<64x256xf32> to vector<64x256xbf16>
      %c0_7 = arith.constant 0 : index
      %c0_8 = arith.constant 0 : index
      %16 = vector.load %arg8[%c0_7, %c0_8] : memref<64x256xbf16, #tpu.memory_space<vmem>>, vector<64x256xbf16>
      tpu.vector_store %arg8[%c0_7, %c0_8], %15 {strides = array<i32>} : memref<64x256xbf16, #tpu.memory_space<vmem>>, vector<64x256xbf16>,
    } else {
    }
    return
  }
  func.func @transform_0(%arg0: i32, %arg1: i32, %arg2: i32, %arg3: memref<1xi32, #tpu.memory_space<smem>>, %arg4: memref<1xi32, #tpu.memory_space<smem>>) -> (i32, i32) {
    %c1_i32 = arith.constant 1 : i32
    %0 = arith.muli %arg0, %c1_i32 : i32
    %1 = arith.addi %0, %arg2 : i32
    %2 = arith.index_cast %1 : i32 to index
    %3 = memref.load %arg3[%2] : memref<1xi32, #tpu.memory_space<smem>>
    %c0_i32 = arith.constant 0 : i32
    return %arg0, %3 : i32, i32
  }
  func.func @transform_1(%arg0: i32, %arg1: i32, %arg2: i32, %arg3: memref<1xi32, #tpu.memory_space<smem>>, %arg4: memref<1xi32, #tpu.memory_space<smem>>) -> (i32, i32) {
    %c1_i32 = arith.constant 1 : i32
    %0 = arith.muli %arg0, %c1_i32 : i32
    %1 = arith.addi %0, %arg2 : i32
    %2 = arith.index_cast %1 : i32 to index
    %3 = memref.load %arg3[%2] : memref<1xi32, #tpu.memory_space<smem>>
    %c0_i32 = arith.constant 0 : i32
    return %3, %arg1 : i32, i32
  }
  func.func @transform_2(%arg0: i32, %arg1: i32, %arg2: i32, %arg3: memref<1xi32, #tpu.memory_space<smem>>, %arg4: memref<1xi32, #tpu.memory_space<smem>>) -> (i32, i32) {
    %c0_i32 = arith.constant 0 : i32
    %c0_i32_0 = arith.constant 0 : i32
    return %arg0, %c0_i32 : i32, i32
  }
  func.func @transform_3(%arg0: i32, %arg1: i32, %arg2: i32, %arg3: memref<1xi32, #tpu.memory_space<smem>>, %arg4: memref<1xi32, #tpu.memory_space<smem>>) -> (i32, i32) {
    %c0_i32 = arith.constant 0 : i32
    return %arg0, %arg1 : i32, i32
  }
}

</mosaic_0001>

<llo_original>
// kernel: tpu_custom_call.1
$region0: #{tpu_custom_call.1}
  #allocation0 [shape = 'u32[]', space=smem, size = 0x4, offset = 0x4, fixed_abs, tag = 'smem constant byte address 0x4 - core index']
  #allocation1 [shape = 'u32[144,128]{1,0:T(1,128)}', space=vmem, size = 0x12000, scoped, tag = 'internal scratch']
  #allocation2 [shape = 'f32[64,256]{1,0:T(8,128)}', space=vmem, size = 0x10000, scoped, tag = 'scratch operand']
  #allocation3 [shape = 's32[1]{0}', space=sflag, size = 0x4, scoped, tag = 'scoped memory for tpu_custom_call.1']
  #allocation4 [shape = 's32[1]{0:T(128)S(6)}', space=smem, size = 0x200, scoped, tag = 'prefetched SMEM operand 0']
  #allocation5 [shape = 's32[1]{0:T(128)S(6)}', space=smem, size = 0x200, scoped, tag = 'prefetched SMEM operand 1']
  %s0 = inlined_call_operand.<no memory space> [shape: s32[1], index: 0, kind: input, shape index: {}]
  %s1 = inlined_call_operand.<no memory space> [shape: s32[1], index: 1, kind: input, shape index: {}]
  %s2 = inlined_call_operand.hbm [shape: s8[64,384], index: 2, kind: input, shape index: {}]
  %s3 = inlined_call_operand.hbm [shape: bf16[384,256], index: 3, kind: input, shape index: {}]
  %s4 = inlined_call_operand.hbm [shape: f32[64,1], index: 4, kind: input, shape index: {}]
  %s5 = inlined_call_operand.hbm [shape: bf16[64,256], index: 5, kind: output, shape index: {}]
  %s6 = sld [smem:[#allocation0]]
  $region46: #{tpu_custom_call.1} parent=0
    _
  %s8 = ssub.s32 1, %s6
  %s9 = scalar_select 0, %s8, %s6
  %10 = sst [smem:[#allocation4]] %s0
  %11 = sst [smem:[#allocation5]] %s1
  $region1: #{tpu_custom_call.1} parent=0
    #allocation6 [shape = 'u8[24576]{0}', space=vmem, size = 0x6000, scoped, tag = 'input window, operand 2, single buffered']
    #allocation7 [shape = 's32[1]{0}', space=sflag, size = 0x4, scoped, tag = 'scoped memory for tpu_custom_call.1']
    #allocation8 [shape = 's32[1]{0}', space=sflag, size = 0x4, scoped, tag = 'scoped memory for tpu_custom_call.1']
    #allocation9 [shape = 'u8[196608]{0}', space=vmem, size = 0x30000, scoped, tag = 'input window, operand 3, single buffered']
    #allocation10 [shape = 's32[1]{0}', space=sflag, size = 0x4, scoped, tag = 'scoped memory for tpu_custom_call.1']
    #allocation11 [shape = 'u8[32768]{0}', space=vmem, size = 0x8000, scoped, tag = 'input window, operand 4, single buffered']
    #allocation12 [shape = 'u8[32768]{0}', space=vmem, size = 0x8000, scoped, tag = 'output window, operand 0, single buffered']
    %12 = vsyncpa [#allocation7], 0
    %13 = vsyncpa [#allocation10], 0
    %14 = vsyncpa [#allocation8], 0
    // Predicated region
    $region2: #{tpu_custom_call.1} parent=1 // pred_check
      _
    $region3: #{tpu_custom_call.1} parent=1 // pred_check_branch
      %16 = sbr.rel (0) target = $region5
    $region4: #{tpu_custom_call.1} parent=1 // pred_region
      %s17 = sadd.s32 0, 0
      %s18 = sld [smem:[#allocation4 + %s17]]
      %s19 = smul.u32 3, %s18
      %s21 = ssub.s32 768, 768
      %22 = vsyncadd [#allocation7], %s21
      %s23 = smul.addr %s19, 128
      %s24 = scalar_lea.hbm %s2, %s23
      %s25 = sshll.u32 [#allocation6], 4
      %s26 = int_to_ptr.vmem [resolvable:$true] %s25
      %31 = dma.hbm_to_vmem [thread:$0]  %s24, 768, %s26, [#allocation7], 384, 384, 24
    $region5: #{tpu_custom_call.1} parent=1 // pred_fallthru
      _
    // Predicated region
    $region6: #{tpu_custom_call.1} parent=1 // pred_check
      _
    $region7: #{tpu_custom_call.1} parent=1 // pred_check_branch
      %33 = sbr.rel (0) target = $region9
    $region8: #{tpu_custom_call.1} parent=1 // pred_region
      %s34 = sadd.s32 0, 0
      %s35 = sld [smem:[#allocation4 + %s34]]
      %s36 = smul.u32 48, %s35
      %s38 = ssub.s32 6144, 6144
      %39 = vsyncadd [#allocation10], %s38
      %s40 = smul.addr %s36, 2
      %s41 = smul.addr %s40, 64
      %s42 = scalar_lea.hbm %s3, %s41
      %s43 = sshll.u32 [#allocation9], 4
      %s44 = int_to_ptr.vmem [resolvable:$true] %s43
      %49 = dma.hbm_to_vmem [thread:$0]  %s42, 6144, %s44, [#allocation10], 128, 128, 8
    $region9: #{tpu_custom_call.1} parent=1 // pred_fallthru
      _
    // Predicated region
    $region10: #{tpu_custom_call.1} parent=1 // pred_check
      _
    $region11: #{tpu_custom_call.1} parent=1 // pred_check_branch
      %51 = sbr.rel (0) target = $region13
    $region12: #{tpu_custom_call.1} parent=1 // pred_region
      %s53 = ssub.s32 1024, 1024
      %54 = vsyncadd [#allocation10], %s53
      %s55 = sshll.u32 [#allocation11], 4
      %s56 = int_to_ptr.vmem [resolvable:$true] %s55
      %61 = dma.hbm_to_vmem [thread:$0]  %s4, 1024, %s56, [#allocation10], 128, 128, 8
    $region13: #{tpu_custom_call.1} parent=1 // pred_fallthru
      _
    // Predicated region
    $region14: #{tpu_custom_call.1} parent=1 // pred_check
      _
    $region15: #{tpu_custom_call.1} parent=1 // pred_check_branch
      %63 = sbr.rel (0) target = $region17
    $region16: #{tpu_custom_call.1} parent=1 // pred_region
      %64 = dma.done [#allocation7], 768
    $region17: #{tpu_custom_call.1} parent=1 // pred_fallthru
      _
    // Predicated region
    $region18: #{tpu_custom_call.1} parent=1 // pred_check
      _
    $region19: #{tpu_custom_call.1} parent=1 // pred_check_branch
      %66 = sbr.rel (0) target = $region21
    $region20: #{tpu_custom_call.1} parent=1 // pred_region
      %67 = dma.done [#allocation10], 6144
    $region21: #{tpu_custom_call.1} parent=1 // pred_fallthru
      _
    // Predicated region
    $region22: #{tpu_custom_call.1} parent=1 // pred_check
      _
    $region23: #{tpu_custom_call.1} parent=1 // pred_check_branch
      %69 = sbr.rel (0) target = $region25
    $region24: #{tpu_custom_call.1} parent=1 // pred_region
      %70 = dma.done [#allocation10], 1024
    $region25: #{tpu_custom_call.1} parent=1 // pred_fallthru
      _
    %s71 = sadd.s32 0, 0
    %s72 = sld [smem:[#allocation4 + %s71]]
    %s73 = smul.u32 3, %s72
    %s74 = sadd.s32 0, 0
    %s75 = sld [smem:[#allocation4 + %s74]]
    %s76 = smul.u32 48, %s75
    %p78 = scmp.eq.s32.totalorder 0, 0
    // Predicated region
    $region26: #{tpu_custom_call.1} parent=1 // pred_check
      %p79 = pneg %p78
    $region27: #{tpu_custom_call.1} parent=1 // pred_check_branch
      %81 = sbr.rel (%p79) target = $region29
    $region28: #{tpu_custom_call.1} parent=1 // pred_region
      %82 = vst [vmem:[#allocation2] sm:$0xff] 0.0
      %83 = vst [vmem:[#allocation2 + $0x8] sm:$0xff] 0.0
      %84 = vst [vmem:[#allocation2 + $0x10] sm:$0xff] 0.0
      %85 = vst [vmem:[#allocation2 + $0x18] sm:$0xff] 0.0
      %86 = vst [vmem:[#allocation2 + $0x20] sm:$0xff] 0.0
      %87 = vst [vmem:[#allocation2 + $0x28] sm:$0xff] 0.0
      %88 = vst [vmem:[#allocation2 + $0x30] sm:$0xff] 0.0
      %89 = vst [vmem:[#allocation2 + $0x38] sm:$0xff] 0.0
      %90 = vst [vmem:[#allocation2 + $0x40] sm:$0xff] 0.0
      %91 = vst [vmem:[#allocation2 + $0x48] sm:$0xff] 0.0
      %92 = vst [vmem:[#allocation2 + $0x50] sm:$0xff] 0.0
      %93 = vst [vmem:[#allocation2 + $0x58] sm:$0xff] 0.0
      %94 = vst [vmem:[#allocation2 + $0x60] sm:$0xff] 0.0
      %95 = vst [vmem:[#allocation2 + $0x68] sm:$0xff] 0.0
      %96 = vst [vmem:[#allocation2 + $0x70] sm:$0xff] 0.0
      %97 = vst [vmem:[#allocation2 + $0x78] sm:$0xff] 0.0
    $region29: #{tpu_custom_call.1} parent=1 // pred_fallthru
      _
    %s98 = sld [smem:[#allocation5]]
    %p99 = scmp.lt.s32.totalorder 0, %s98
    // Predicated region
    $region30: #{tpu_custom_call.1} parent=1 // pred_check
      %p100 = pneg %p99
    $region31: #{tpu_custom_call.1} parent=1 // pred_check_branch
      %102 = sbr.rel (%p100) target = $region33
    $region32: #{tpu_custom_call.1} parent=1 // pred_region
      %v103 = vld [vmem:[#allocation6] sm:$0xff]
      %v104 = vld [vmem:[#allocation6 + $0x8] sm:$0xff]
      %v105 = vld [vmem:[#allocation6 + $0x10] sm:$0xff]
      %v106 = vld [vmem:[#allocation6 + $0x18] sm:$0xff]
      %v107 = vld [vmem:[#allocation6 + $0x20] sm:$0xff]
      %v108 = vld [vmem:[#allocation6 + $0x28] sm:$0xff]
      %v109 = vunpack.c.l.s8.bf16 %v103
      %v110 = vunpack.c.l.s8.bf16 %v104
      %v111 = vunpack.c.l.s8.bf16 %v105
      %v112 = vunpack.c.h.s8.bf16 %v103
      %v113 = vunpack.c.h.s8.bf16 %v104
      %v114 = vunpack.c.h.s8.bf16 %v105
      %v115 = vunpack.c.l.s8.bf16 %v106
      %v116 = vunpack.c.l.s8.bf16 %v107
      %v117 = vunpack.c.l.s8.bf16 %v108
      %v118 = vunpack.c.h.s8.bf16 %v106
      %v119 = vunpack.c.h.s8.bf16 %v107
      %v120 = vunpack.c.h.s8.bf16 %v108
      %v121 = vld [vmem:[#allocation2] sm:$0xff]
      %v122 = vld [vmem:[#allocation2 + $0x8] sm:$0xff]
      %v123 = vld [vmem:[#allocation2 + $0x10] sm:$0xff]
      %v124 = vld [vmem:[#allocation2 + $0x18] sm:$0xff]
      %v125 = vld [vmem:[#allocation2 + $0x20] sm:$0xff]
      %v126 = vld [vmem:[#allocation2 + $0x28] sm:$0xff]
      %v127 = vld [vmem:[#allocation2 + $0x30] sm:$0xff]
      %v128 = vld [vmem:[#allocation2 + $0x38] sm:$0xff]
      %v129 = vld [vmem:[#allocation2 + $0x40] sm:$0xff]
      %v130 = vld [vmem:[#allocation2 + $0x48] sm:$0xff]
      %v131 = vld [vmem:[#allocation2 + $0x50] sm:$0xff]
      %v132 = vld [vmem:[#allocation2 + $0x58] sm:$0xff]
      %v133 = vld [vmem:[#allocation2 + $0x60] sm:$0xff]
      %v134 = vld [vmem:[#allocation2 + $0x68] sm:$0xff]
      %v135 = vld [vmem:[#allocation2 + $0x70] sm:$0xff]
      %v136 = vld [vmem:[#allocation2 + $0x78] sm:$0xff]
      %v137 = vld [vmem:[#allocation9] sm:$0xff]
      %v138 = vld [vmem:[#allocation9 + $0x8] sm:$0xff]
      %v139 = vld [vmem:[#allocation9 + $0x10] sm:$0xff]
      %v140 = vld [vmem:[#allocation9 + $0x18] sm:$0xff]
      %v141 = vld [vmem:[#allocation9 + $0x20] sm:$0xff]
      %v142 = vld [vmem:[#allocation9 + $0x28] sm:$0xff]
      %v143 = vld [vmem:[#allocation9 + $0x30] sm:$0xff]
      %v144 = vld [vmem:[#allocation9 + $0x38] sm:$0xff]
      %v145 = vld [vmem:[#allocation9 + $0x40] sm:$0xff]
      %v146 = vld [vmem:[#allocation9 + $0x48] sm:$0xff]
      %v147 = vld [vmem:[#allocation9 + $0x50] sm:$0xff]
      %v148 = vld [vmem:[#allocation9 + $0x58] sm:$0xff]
      %v149 = vld [vmem:[#allocation9 + $0x60] sm:$0xff]
      %v150 = vld [vmem:[#allocation9 + $0x68] sm:$0xff]
      %v151 = vld [vmem:[#allocation9 + $0x70] sm:$0xff]
      %v152 = vld [vmem:[#allocation9 + $0x78] sm:$0xff]
      %v153 = vld [vmem:[#allocation9 + $0x80] sm:$0xff]
      %v154 = vld [vmem:[#allocation9 + $0x88] sm:$0xff]
      %v155 = vld [vmem:[#allocation9 + $0x90] sm:$0xff]
      %v156 = vld [vmem:[#allocation9 + $0x98] sm:$0xff]
      %v157 = vld [vmem:[#allocation9 + $0xa0] sm:$0xff]
      %v158 = vld [vmem:[#allocation9 + $0xa8] sm:$0xff]
      %v159 = vld [vmem:[#allocation9 + $0xb0] sm:$0xff]
      %v160 = vld [vmem:[#allocation9 + $0xb8] sm:$0xff]
      %v161 = vld [vmem:[#allocation9 + $0xc0] sm:$0xff]
      %v162 = vld [vmem:[#allocation9 + $0xc8] sm:$0xff]
      %v163 = vld [vmem:[#allocation9 + $0xd0] sm:$0xff]
      %v164 = vld [vmem:[#allocation9 + $0xd8] sm:$0xff]
      %v165 = vld [vmem:[#allocation9 + $0xe0] sm:$0xff]
      %v166 = vld [vmem:[#allocation9 + $0xe8] sm:$0xff]
      %v167 = vld [vmem:[#allocation9 + $0xf0] sm:$0xff]
      %v168 = vld [vmem:[#allocation9 + $0xf8] sm:$0xff]
      %v169 = vld [vmem:[#allocation9 + $0x100] sm:$0xff]
      %v170 = vld [vmem:[#allocation9 + $0x108] sm:$0xff]
      %v171 = vld [vmem:[#allocation9 + $0x110] sm:$0xff]
      %v172 = vld [vmem:[#allocation9 + $0x118] sm:$0xff]
      %v173 = vld [vmem:[#allocation9 + $0x120] sm:$0xff]
      %v174 = vld [vmem:[#allocation9 + $0x128] sm:$0xff]
      %v175 = vld [vmem:[#allocation9 + $0x130] sm:$0xff]
      %v176 = vld [vmem:[#allocation9 + $0x138] sm:$0xff]
      %v177 = vld [vmem:[#allocation9 + $0x140] sm:$0xff]
      %v178 = vld [vmem:[#allocation9 + $0x148] sm:$0xff]
      %v179 = vld [vmem:[#allocation9 + $0x150] sm:$0xff]
      %v180 = vld [vmem:[#allocation9 + $0x158] sm:$0xff]
      %v181 = vld [vmem:[#allocation9 + $0x160] sm:$0xff]
      %v182 = vld [vmem:[#allocation9 + $0x168] sm:$0xff]
      %v183 = vld [vmem:[#allocation9 + $0x170] sm:$0xff]
      %v184 = vld [vmem:[#allocation9 + $0x178] sm:$0xff]
      %v233 = vunpack.c.l.b16 %v137
      %v234 = vunpack.c.h.b16 %v137
      %v235 = vunpack.c.l.b16 %v138
      %v236 = vunpack.c.h.b16 %v138
      %v237 = vunpack.c.l.b16 %v139
      %v238 = vunpack.c.h.b16 %v139
      %v239 = vunpack.c.l.b16 %v140
      %v240 = vunpack.c.h.b16 %v140
      %v241 = vunpack.c.l.b16 %v141
      %v242 = vunpack.c.h.b16 %v141
      %v243 = vunpack.c.l.b16 %v142
      %v244 = vunpack.c.h.b16 %v142
      %v245 = vunpack.c.l.b16 %v143
      %v246 = vunpack.c.h.b16 %v143
      %v247 = vunpack.c.l.b16 %v144
      %v248 = vunpack.c.h.b16 %v144
      %v249 = vunpack.c.l.b16 %v145
      %v250 = vunpack.c.h.b16 %v145
      %v251 = vunpack.c.l.b16 %v146
      %v252 = vunpack.c.h.b16 %v146
      %v253 = vunpack.c.l.b16 %v147
      %v254 = vunpack.c.h.b16 %v147
      %v255 = vunpack.c.l.b16 %v148
      %v256 = vunpack.c.h.b16 %v148
      %v257 = vunpack.c.l.b16 %v149
      %v258 = vunpack.c.h.b16 %v149
      %v259 = vunpack.c.l.b16 %v150
      %v260 = vunpack.c.h.b16 %v150
      %v261 = vunpack.c.l.b16 %v151
      %v262 = vunpack.c.h.b16 %v151
      %v263 = vunpack.c.l.b16 %v152
      %v264 = vunpack.c.h.b16 %v152
      %v265 = vunpack.c.l.b16 %v153
      %v266 = vunpack.c.h.b16 %v153
      %v267 = vunpack.c.l.b16 %v154
      %v268 = vunpack.c.h.b16 %v154
      %v269 = vunpack.c.l.b16 %v155
      %v270 = vunpack.c.h.b16 %v155
      %v271 = vunpack.c.l.b16 %v156
      %v272 = vunpack.c.h.b16 %v156
      %v273 = vunpack.c.l.b16 %v157
      %v274 = vunpack.c.h.b16 %v157
      %v275 = vunpack.c.l.b16 %v158
      %v276 = vunpack.c.h.b16 %v158
      %v277 = vunpack.c.l.b16 %v159
      %v278 = vunpack.c.h.b16 %v159
      %v279 = vunpack.c.l.b16 %v160
      %v280 = vunpack.c.h.b16 %v160
      %v281 = vunpack.c.l.b16 %v161
      %v282 = vunpack.c.h.b16 %v161
      %v283 = vunpack.c.l.b16 %v162
      %v284 = vunpack.c.h.b16 %v162
      %v285 = vunpack.c.l.b16 %v163
      %v286 = vunpack.c.h.b16 %v163
      %v287 = vunpack.c.l.b16 %v164
      %v288 = vunpack.c.h.b16 %v164
      %v289 = vunpack.c.l.b16 %v165
      %v290 = vunpack.c.h.b16 %v165
      %v291 = vunpack.c.l.b16 %v166
      %v292 = vunpack.c.h.b16 %v166
      %v293 = vunpack.c.l.b16 %v167
      %v294 = vunpack.c.h.b16 %v167
      %v295 = vunpack.c.l.b16 %v168
      %v296 = vunpack.c.h.b16 %v168
      %v297 = vunpack.c.l.b16 %v169
      %v298 = vunpack.c.h.b16 %v169
      %v299 = vunpack.c.l.b16 %v170
      %v300 = vunpack.c.h.b16 %v170
      %v301 = vunpack.c.l.b16 %v171
      %v302 = vunpack.c.h.b16 %v171
      %v303 = vunpack.c.l.b16 %v172
      %v304 = vunpack.c.h.b16 %v172
      %v305 = vunpack.c.l.b16 %v173
      %v306 = vunpack.c.h.b16 %v173
      %v307 = vunpack.c.l.b16 %v174
      %v308 = vunpack.c.h.b16 %v174
      %v309 = vunpack.c.l.b16 %v175
      %v310 = vunpack.c.h.b16 %v175
      %v311 = vunpack.c.l.b16 %v176
      %v312 = vunpack.c.h.b16 %v176
      %v313 = vunpack.c.l.b16 %v177
      %v314 = vunpack.c.h.b16 %v177
      %v315 = vunpack.c.l.b16 %v178
      %v316 = vunpack.c.h.b16 %v178
      %v317 = vunpack.c.l.b16 %v179
      %v318 = vunpack.c.h.b16 %v179
      %v319 = vunpack.c.l.b16 %v180
      %v320 = vunpack.c.h.b16 %v180
      %v321 = vunpack.c.l.b16 %v181
      %v322 = vunpack.c.h.b16 %v181
      %v323 = vunpack.c.l.b16 %v182
      %v324 = vunpack.c.h.b16 %v182
      %v325 = vunpack.c.l.b16 %v183
      %v326 = vunpack.c.h.b16 %v183
      %v327 = vunpack.c.l.b16 %v184
      %v328 = vunpack.c.h.b16 %v184
      %v329 = vpack.c.b16 %v235, %v233
      %v330 = vpack.c.b16 %v236, %v234
      %v331 = vpack.c.b16 %v239, %v237
      %v332 = vpack.c.b16 %v240, %v238
      %v333 = vpack.c.b16 %v243, %v241
      %v334 = vpack.c.b16 %v244, %v242
      %v335 = vpack.c.b16 %v247, %v245
      %v336 = vpack.c.b16 %v248, %v246
      %v337 = vpack.c.b16 %v251, %v249
      %v338 = vpack.c.b16 %v252, %v250
      %v339 = vpack.c.b16 %v255, %v253
      %v340 = vpack.c.b16 %v256, %v254
      %v341 = vpack.c.b16 %v259, %v257
      %v342 = vpack.c.b16 %v260, %v258
      %v343 = vpack.c.b16 %v263, %v261
      %v344 = vpack.c.b16 %v264, %v262
      %v345 = vpack.c.b16 %v267, %v265
      %v346 = vpack.c.b16 %v268, %v266
      %v347 = vpack.c.b16 %v271, %v269
      %v348 = vpack.c.b16 %v272, %v270
      %v349 = vpack.c.b16 %v275, %v273
      %v350 = vpack.c.b16 %v276, %v274
      %v351 = vpack.c.b16 %v279, %v277
      %v352 = vpack.c.b16 %v280, %v278
      %v353 = vpack.c.b16 %v283, %v281
      %v354 = vpack.c.b16 %v284, %v282
      %v355 = vpack.c.b16 %v287, %v285
      %v356 = vpack.c.b16 %v288, %v286
      %v357 = vpack.c.b16 %v291, %v289
      %v358 = vpack.c.b16 %v292, %v290
      %v359 = vpack.c.b16 %v295, %v293
      %v360 = vpack.c.b16 %v296, %v294
      %v361 = vpack.c.b16 %v299, %v297
      %v362 = vpack.c.b16 %v300, %v298
      %v363 = vpack.c.b16 %v303, %v301
      %v364 = vpack.c.b16 %v304, %v302
      %v365 = vpack.c.b16 %v307, %v305
      %v366 = vpack.c.b16 %v308, %v306
      %v367 = vpack.c.b16 %v311, %v309
      %v368 = vpack.c.b16 %v312, %v310
      %v369 = vpack.c.b16 %v315, %v313
      %v370 = vpack.c.b16 %v316, %v314
      %v371 = vpack.c.b16 %v319, %v317
      %v372 = vpack.c.b16 %v320, %v318
      %v373 = vpack.c.b16 %v323, %v321
      %v374 = vpack.c.b16 %v324, %v322
      %v375 = vpack.c.b16 %v327, %v325
      %v376 = vpack.c.b16 %v328, %v326
      %425 = vmatprep.subr.bf16.mxu0 %v330
      %426 = vmatpush1.bf16.msra.mxu0 %v329
      %427 = vmatprep.subr.bf16.mxu0 %v332
      %428 = vmatpush1.bf16.msra.mxu0 %v331
      %429 = vmatprep.subr.bf16.mxu0 %v334
      %430 = vmatpush1.bf16.msra.mxu0 %v333
      %431 = vmatprep.subr.bf16.mxu0 %v336
      %432 = vmatpush1.bf16.msra.mxu0 %v335
      %433 = vmatprep.subr.bf16.mxu0 %v338
      %434 = vmatpush1.bf16.msra.mxu0 %v337
      %435 = vmatprep.subr.bf16.mxu0 %v340
      %436 = vmatpush1.bf16.msra.mxu0 %v339
      %437 = vmatprep.subr.bf16.mxu0 %v342
      %438 = vmatpush1.bf16.msra.mxu0 %v341
      %439 = vmatprep.subr.bf16.mxu0 %v344
      %440 = vmatpush1.bf16.msra.mxu0 %v343
      %441 = vmatprep.subr.bf16.mxu0 %v346
      %442 = vmatpush1.bf16.msra.mxu0 %v345
      %443 = vmatprep.subr.bf16.mxu0 %v348
      %444 = vmatpush1.bf16.msra.mxu0 %v347
      %445 = vmatprep.subr.bf16.mxu0 %v350
      %446 = vmatpush1.bf16.msra.mxu0 %v349
      %447 = vmatprep.subr.bf16.mxu0 %v352
      %448 = vmatpush1.bf16.msra.mxu0 %v351
      %449 = vmatprep.subr.bf16.mxu0 %v354
      %450 = vmatpush1.bf16.msra.mxu0 %v353
      %451 = vmatprep.subr.bf16.mxu0 %v356
      %452 = vmatpush1.bf16.msra.mxu0 %v355
      %453 = vmatprep.subr.bf16.mxu0 %v358
      %454 = vmatpush1.bf16.msra.mxu0 %v357
      %455 = vmatprep.subr.bf16.mxu0 %v360
      %456 = vmatpush1.bf16.msra.mxu0 %v359
      %457 = vmatprep.mubr.bf16.mxu0 %v110
      %458 = vmatmul.mubr.bf16.gmra.mrb[0].mxu0 %v109
      %v459 = vpop.f32.mrb[0].mxu0
      %v460 = vadd.f32 0.0, %v459
      %v461 = vpop.f32.mrb[0].mxu0
      %v462 = vadd.f32 0.0, %v461
      %v463 = vpop.f32.mrb[0].mxu0
      %v464 = vadd.f32 0.0, %v463
      %v465 = vpop.f32.mrb[0].mxu0
      %v466 = vadd.f32 0.0, %v465
      %467 = vmatprep.mubr.bf16.mxu0 %v113
      %468 = vmatmul.mubr.bf16.gmra.mrb[0].mxu0 %v112
      %v469 = vpop.f32.mrb[0].mxu0
      %v470 = vadd.f32 0.0, %v469
      %v471 = vpop.f32.mrb[0].mxu0
      %v472 = vadd.f32 0.0, %v471
      %v473 = vpop.f32.mrb[0].mxu0
      %v474 = vadd.f32 0.0, %v473
      %v475 = vpop.f32.mrb[0].mxu0
      %v476 = vadd.f32 0.0, %v475
      %477 = vmatprep.mubr.bf16.mxu0 %v116
      %478 = vmatmul.mubr.bf16.gmra.mrb[0].mxu0 %v115
      %v479 = vpop.f32.mrb[0].mxu0
      %v480 = vadd.f32 0.0, %v479
      %v481 = vpop.f32.mrb[0].mxu0
      %v482 = vadd.f32 0.0, %v481
      %v483 = vpop.f32.mrb[0].mxu0
      %v484 = vadd.f32 0.0, %v483
      %v485 = vpop.f32.mrb[0].mxu0
      %v486 = vadd.f32 0.0, %v485
      %487 = vmatprep.mubr.bf16.mxu0 %v119
      %488 = vmatmul.mubr.bf16.gmra.mrb[0].mxu0 %v118
      %v489 = vpop.f32.mrb[0].mxu0
      %v490 = vadd.f32 0.0, %v489
      %v491 = vpop.f32.mrb[0].mxu0
      %v492 = vadd.f32 0.0, %v491
      %v493 = vpop.f32.mrb[0].mxu0
      %v494 = vadd.f32 0.0, %v493
      %v495 = vpop.f32.mrb[0].mxu0
      %v496 = vadd.f32 0.0, %v495
      %497 = vdwg.mxu0
      %498 = vmatprep.subr.bf16.mxu0 %v362
      %499 = vmatpush1.bf16.msra.mxu0 %v361
      %500 = vmatprep.subr.bf16.mxu0 %v364
      %501 = vmatpush1.bf16.msra.mxu0 %v363
      %502 = vmatprep.subr.bf16.mxu0 %v366
      %503 = vmatpush1.bf16.msra.mxu0 %v365
      %504 = vmatprep.subr.bf16.mxu0 %v368
      %505 = vmatpush1.bf16.msra.mxu0 %v367
      %506 = vmatprep.subr.bf16.mxu0 %v370
      %507 = vmatpush1.bf16.msra.mxu0 %v369
      %508 = vmatprep.subr.bf16.mxu0 %v372
      %509 = vmatpush1.bf16.msra.mxu0 %v371
      %510 = vmatprep.subr.bf16.mxu0 %v374
      %511 = vmatpush1.bf16.msra.mxu0 %v373
      %512 = vmatprep.subr.bf16.mxu0 %v376
      %513 = vmatpush1.bf16.msra.mxu0 %v375
      %514 = vmatprep.subr.bf16.mxu0 0
      %515 = vmatpush1.bf16.msra.mxu0 0
      %516 = vmatprep.subr.bf16.mxu0 0
      %517 = vmatpush1.bf16.msra.mxu0 0
      %518 = vmatprep.subr.bf16.mxu0 0
      %519 = vmatpush1.bf16.msra.mxu0 0
      %520 = vmatprep.subr.bf16.mxu0 0
      %521 = vmatpush1.bf16.msra.mxu0 0
      %522 = vmatprep.subr.bf16.mxu0 0
      %523 = vmatpush1.bf16.msra.mxu0 0
      %524 = vmatprep.subr.bf16.mxu0 0
      %525 = vmatpush1.bf16.msra.mxu0 0
      %526 = vmatprep.subr.bf16.mxu0 0
      %527 = vmatpush1.bf16.msra.mxu0 0
      %528 = vmatprep.subr.bf16.mxu0 0
      %529 = vmatpush1.bf16.msra.mxu0 0
      %530 = vmatprep.mubr.bf16.mxu0 0
      %531 = vmatmul.mubr.bf16.gmra.mrb[0].mxu0 %v111
      %v532 = vpop.f32.mrb[0].mxu0
      %v533 = vadd.f32 %v460, %v532
      %v534 = vpop.f32.mrb[0].mxu0
      %v535 = vadd.f32 %v462, %v534
      %v536 = vpop.f32.mrb[0].mxu0
      %v537 = vadd.f32 %v464, %v536
      %v538 = vpop.f32.mrb[0].mxu0
      %v539 = vadd.f32 %v466, %v538
      %540 = vmatprep.mubr.bf16.mxu0 0
      %541 = vmatmul.mubr.bf16.gmra.mrb[0].mxu0 %v114
      %v542 = vpop.f32.mrb[0].mxu0
      %v543 = vadd.f32 %v470, %v542
      %v544 = vpop.f32.mrb[0].mxu0
      %v545 = vadd.f32 %v472, %v544
      %v546 = vpop.f32.mrb[0].mxu0
      %v547 = vadd.f32 %v474, %v546
      %v548 = vpop.f32.mrb[0].mxu0
      %v549 = vadd.f32 %v476, %v548
      %550 = vmatprep.mubr.bf16.mxu0 0
      %551 = vmatmul.mubr.bf16.gmra.mrb[0].mxu0 %v117
      %v552 = vpop.f32.mrb[0].mxu0
      %v553 = vadd.f32 %v480, %v552
      %v554 = vpop.f32.mrb[0].mxu0
      %v555 = vadd.f32 %v482, %v554
      %v556 = vpop.f32.mrb[0].mxu0
      %v557 = vadd.f32 %v484, %v556
      %v558 = vpop.f32.mrb[0].mxu0
      %v559 = vadd.f32 %v486, %v558
      %560 = vmatprep.mubr.bf16.mxu0 0
      %561 = vmatmul.mubr.bf16.gmra.mrb[0].mxu0 %v120
      %v562 = vpop.f32.mrb[0].mxu0
      %v563 = vadd.f32 %v490, %v562
      %v564 = vpop.f32.mrb[0].mxu0
      %v565 = vadd.f32 %v492, %v564
      %v566 = vpop.f32.mrb[0].mxu0
      %v567 = vadd.f32 %v494, %v566
      %v568 = vpop.f32.mrb[0].mxu0
      %v569 = vadd.f32 %v496, %v568
      %570 = vdwg.mxu0
      %v571 = vadd.f32 %v121, %v533
      %v572 = vadd.f32 %v122, %v535
      %v573 = vadd.f32 %v123, %v537
      %v574 = vadd.f32 %v124, %v539
      %v575 = vadd.f32 %v125, %v543
      %v576 = vadd.f32 %v126, %v545
      %v577 = vadd.f32 %v127, %v547
      %v578 = vadd.f32 %v128, %v549
      %v579 = vadd.f32 %v129, %v553
      %v580 = vadd.f32 %v130, %v555
      %v581 = vadd.f32 %v131, %v557
      %v582 = vadd.f32 %v132, %v559
      %v583 = vadd.f32 %v133, %v563
      %v584 = vadd.f32 %v134, %v565
      %v585 = vadd.f32 %v135, %v567
      %v586 = vadd.f32 %v136, %v569
      %587 = vst [vmem:[#allocation2] sm:$0xff] %v571
      %588 = vst [vmem:[#allocation2 + $0x8] sm:$0xff] %v572
      %589 = vst [vmem:[#allocation2 + $0x10] sm:$0xff] %v573
      %590 = vst [vmem:[#allocation2 + $0x18] sm:$0xff] %v574
      %591 = vst [vmem:[#allocation2 + $0x20] sm:$0xff] %v575
      %592 = vst [vmem:[#allocation2 + $0x28] sm:$0xff] %v576
      %593 = vst [vmem:[#allocation2 + $0x30] sm:$0xff] %v577
      %594 = vst [vmem:[#allocation2 + $0x38] sm:$0xff] %v578
      %595 = vst [vmem:[#allocation2 + $0x40] sm:$0xff] %v579
      %596 = vst [vmem:[#allocation2 + $0x48] sm:$0xff] %v580
      %597 = vst [vmem:[#allocation2 + $0x50] sm:$0xff] %v581
      %598 = vst [vmem:[#allocation2 + $0x58] sm:$0xff] %v582
      %599 = vst [vmem:[#allocation2 + $0x60] sm:$0xff] %v583
      %600 = vst [vmem:[#allocation2 + $0x68] sm:$0xff] %v584
      %601 = vst [vmem:[#allocation2 + $0x70] sm:$0xff] %v585
      %602 = vst [vmem:[#allocation2 + $0x78] sm:$0xff] %v586
    $region33: #{tpu_custom_call.1} parent=1 // pred_fallthru
      _
    // Predicated region
    $region34: #{tpu_custom_call.1} parent=1 // pred_check
      %p603 = pneg %p78
    $region35: #{tpu_custom_call.1} parent=1 // pred_check_branch
      %605 = sbr.rel (%p603) target = $region37
    $region36: #{tpu_custom_call.1} parent=1 // pred_region
      %v606 = vld [vmem:[#allocation2] sm:$0xff]
      %v607 = vld [vmem:[#allocation2 + $0x8] sm:$0xff]
      %v608 = vld [vmem:[#allocation2 + $0x10] sm:$0xff]
      %v609 = vld [vmem:[#allocation2 + $0x18] sm:$0xff]
      %v610 = vld [vmem:[#allocation2 + $0x20] sm:$0xff]
      %v611 = vld [vmem:[#allocation2 + $0x28] sm:$0xff]
      %v612 = vld [vmem:[#allocation2 + $0x30] sm:$0xff]
      %v613 = vld [vmem:[#allocation2 + $0x38] sm:$0xff]
      %v614 = vld [vmem:[#allocation2 + $0x40] sm:$0xff]
      %v615 = vld [vmem:[#allocation2 + $0x48] sm:$0xff]
      %v616 = vld [vmem:[#allocation2 + $0x50] sm:$0xff]
      %v617 = vld [vmem:[#allocation2 + $0x58] sm:$0xff]
      %v618 = vld [vmem:[#allocation2 + $0x60] sm:$0xff]
      %v619 = vld [vmem:[#allocation2 + $0x68] sm:$0xff]
      %v620 = vld [vmem:[#allocation2 + $0x70] sm:$0xff]
      %v621 = vld [vmem:[#allocation2 + $0x78] sm:$0xff]
      %v622 = vld [vmem:[#allocation11] sm:$0xff]
      %v623 = vld [vmem:[#allocation11 + $0x8] sm:$0xff]
      %v624 = vld [vmem:[#allocation11 + $0x10] sm:$0xff]
      %v625 = vld [vmem:[#allocation11 + $0x18] sm:$0xff]
      %v626 = vld [vmem:[#allocation11 + $0x20] sm:$0xff]
      %v627 = vld [vmem:[#allocation11 + $0x28] sm:$0xff]
      %v628 = vld [vmem:[#allocation11 + $0x30] sm:$0xff]
      %v629 = vld [vmem:[#allocation11 + $0x38] sm:$0xff]
      %631 = vset.pattern.permute.xlu0 0
      %632 = vperm.xlu0 %631, %v622
      %v633 = vpop.permute.xlu0 %632
      %636 = vset.pattern.permute.xlu0 0
      %637 = vperm.xlu0 %636, %v623
      %v638 = vpop.permute.xlu0 %637
      %641 = vset.pattern.permute.xlu0 0
      %642 = vperm.xlu0 %641, %v624
      %v643 = vpop.permute.xlu0 %642
      %646 = vset.pattern.permute.xlu0 0
      %647 = vperm.xlu0 %646, %v625
      %v648 = vpop.permute.xlu0 %647
      %651 = vset.pattern.permute.xlu0 0
      %652 = vperm.xlu0 %651, %v626
      %v653 = vpop.permute.xlu0 %652
      %656 = vset.pattern.permute.xlu0 0
      %657 = vperm.xlu0 %656, %v627
      %v658 = vpop.permute.xlu0 %657
      %661 = vset.pattern.permute.xlu0 0
      %662 = vperm.xlu0 %661, %v628
      %v663 = vpop.permute.xlu0 %662
      %666 = vset.pattern.permute.xlu0 0
      %667 = vperm.xlu0 %666, %v629
      %v668 = vpop.permute.xlu0 %667
      %v670 = vmul.f32 %v606, %v633
      %v671 = vmul.f32 %v607, %v633
      %v672 = vmul.f32 %v608, %v638
      %v673 = vmul.f32 %v609, %v638
      %v674 = vmul.f32 %v610, %v643
      %v675 = vmul.f32 %v611, %v643
      %v676 = vmul.f32 %v612, %v648
      %v677 = vmul.f32 %v613, %v648
      %v678 = vmul.f32 %v614, %v653
      %v679 = vmul.f32 %v615, %v653
      %v680 = vmul.f32 %v616, %v658
      %v681 = vmul.f32 %v617, %v658
      %v682 = vmul.f32 %v618, %v663
      %v683 = vmul.f32 %v619, %v663
      %v684 = vmul.f32 %v620, %v668
      %v685 = vmul.f32 %v621, %v668
      %v686 = vpack.c.bf16 %v672, %v670
      %v687 = vpack.c.bf16 %v673, %v671
      %v688 = vpack.c.bf16 %v676, %v674
      %v689 = vpack.c.bf16 %v677, %v675
      %v690 = vpack.c.bf16 %v680, %v678
      %v691 = vpack.c.bf16 %v681, %v679
      %v692 = vpack.c.bf16 %v684, %v682
      %v693 = vpack.c.bf16 %v685, %v683
      %v702 = vunpack.c.l.b16 %v686
      %v703 = vunpack.c.l.b16 %v687
      %v704 = vunpack.c.h.b16 %v686
      %v705 = vunpack.c.h.b16 %v687
      %v706 = vunpack.c.l.b16 %v688
      %v707 = vunpack.c.l.b16 %v689
      %v708 = vunpack.c.h.b16 %v688
      %v709 = vunpack.c.h.b16 %v689
      %v710 = vunpack.c.l.b16 %v690
      %v711 = vunpack.c.l.b16 %v691
      %v712 = vunpack.c.h.b16 %v690
      %v713 = vunpack.c.h.b16 %v691
      %v714 = vunpack.c.l.b16 %v692
      %v715 = vunpack.c.l.b16 %v693
      %v716 = vunpack.c.h.b16 %v692
      %v717 = vunpack.c.h.b16 %v693
      %v718 = vpack.c.b16 %v703, %v702
      %v719 = vpack.c.b16 %v705, %v704
      %v720 = vpack.c.b16 %v707, %v706
      %v721 = vpack.c.b16 %v709, %v708
      %v722 = vpack.c.b16 %v711, %v710
      %v723 = vpack.c.b16 %v713, %v712
      %v724 = vpack.c.b16 %v715, %v714
      %v725 = vpack.c.b16 %v717, %v716
      %734 = vst [vmem:[#allocation12] sm:$0xff] %v718
      %735 = vst [vmem:[#allocation12 + $0x8] sm:$0xff] %v719
      %736 = vst [vmem:[#allocation12 + $0x10] sm:$0xff] %v720
      %737 = vst [vmem:[#allocation12 + $0x18] sm:$0xff] %v721
      %738 = vst [vmem:[#allocation12 + $0x20] sm:$0xff] %v722
      %739 = vst [vmem:[#allocation12 + $0x28] sm:$0xff] %v723
      %740 = vst [vmem:[#allocation12 + $0x30] sm:$0xff] %v724
      %741 = vst [vmem:[#allocation12 + $0x38] sm:$0xff] %v725
    $region37: #{tpu_custom_call.1} parent=1 // pred_fallthru
      _
    // Predicated region
    $region38: #{tpu_custom_call.1} parent=1 // pred_check
      _
    $region39: #{tpu_custom_call.1} parent=1 // pred_check_branch
      %743 = sbr.rel (0) target = $region41
    $region40: #{tpu_custom_call.1} parent=1 // pred_region
      %s745 = ssub.s32 1024, 1024
      %746 = vsyncadd [#allocation8], %s745
      %s747 = sshll.u32 [#allocation12], 4
      %s748 = int_to_ptr.vmem [resolvable:$true] %s747
      %753 = dma.vmem_to_hbm [thread:$0]  %s748, 1024, %s5, [#allocation8], 128, 128, 8
    $region41: #{tpu_custom_call.1} parent=1 // pred_fallthru
      _
    // Predicated region
    $region42: #{tpu_custom_call.1} parent=1 // pred_check
      _
    $region43: #{tpu_custom_call.1} parent=1 // pred_check_branch
      %755 = sbr.rel (0) target = $region45
    $region44: #{tpu_custom_call.1} parent=1 // pred_region
      %756 = dma.done [#allocation8], 1024
    $region45: #{tpu_custom_call.1} parent=1 // pred_fallthru
      _
    %757 = vsyncpa [#allocation7], 1
    %758 = vsyncpa [#allocation10], 1
    %759 = vsyncpa [#allocation8], 1

</llo_original>
